<compile_context>
chip_gen: v6e
topology: v6e:2x2x1
jax: 0.10.0
libtpu: 0.0.40
codegen_flags: <defaults>
</compile_context>

<pallas_src>
import functools
import math

import jax
import jax.numpy as jnp
from jax.experimental import pallas as pl
from jax.experimental.pallas import tpu as pltpu

# TODO(synk): BatchNorm1d is evaluated in inference mode (running_mean=0,
# running_var=1, gamma=1, beta=0); training-mode batch statistics are not modeled.
BN_EPS = 1e-5
_VMEM_LIMIT = 32 * 1024 * 1024  # safe on v5e/v6e (128 MiB phys) and v7x (64 MiB phys)


# --------------------------- block-size selection ---------------------------
def _choose_blocks(c, hw, t, target_bytes=2 * 1024 * 1024):
    """Pick (c_blk, hw_blk) so one fp32 (T, c_blk, hw_blk) tile is <= ~2 MB.

    Candidates respect the (8,128) BlockSpec rule for every array involved:
    c_blk is either the full C or a multiple of 128 dividing C; hw_blk is the
    full HW or a multiple of 128 dividing HW.  Lane-dense (full-HW) tiles are
    preferred.
    """
    def _cands(n):
        out = [n]
        m = 128
        while m < n:
            if n % m == 0:
                out.append(m)
            m += 128
        return sorted(set(out), reverse=True)

    c_cands, hw_cands = _cands(c), _cands(hw)
    for hw_blk in hw_cands:
        for c_blk in c_cands:
            if t * c_blk * hw_blk * 4 <= target_bytes:
                return c_blk, hw_blk
    return c_cands[-1], hw_cands[-1]


# ------------- kernel 1: spatial average pool  (nb,T,C,HW) -> (nb,T,C) -------------
def _pool_kernel(x_ref, o_ref, *, inv_hw):
    j = pl.program_id(2)

    @pl.when(j == 0)
    def _():
        o_ref[...] = jnp.zeros_like(o_ref)

    o_ref[...] += jnp.sum(x_ref[...], axis=-1)

    @pl.when(j == pl.num_programs(2) - 1)
    def _():
        o_ref[...] = o_ref[...] * inv_hw


def spatial_pool(x4, c_blk, hw_blk):
    nb, t, c, hw = x4.shape
    body = functools.partial(_pool_kernel, inv_hw=float(1.0 / hw))
    return pl.pallas_call(
        body,
        out_shape=jax.ShapeDtypeStruct((nb, t, c), jnp.float32),
        grid_spec=pltpu.PrefetchScalarGridSpec(
            num_scalar_prefetch=0,
            grid=(nb, c // c_blk, hw // hw_blk),
            in_specs=[pl.BlockSpec((None, t, c_blk, hw_blk),
                                   lambda b, ci, hi: (b, 0, ci, hi))],
            out_specs=pl.BlockSpec((None, t, c_blk), lambda b, ci, hi: (b, 0, ci)),
        ),
        compiler_params=pltpu.CompilerParams(
            dimension_semantics=("parallel", "parallel", "arbitrary"),
            vmem_limit_bytes=_VMEM_LIMIT),
    )(x4)


# --------- kernel 2: fused global (G) + local (L) branches, one small launch ---------
def _branches_kernel(theta_g_ref, taps_ref, wg1_ref, wg2_ref, wl1_ref, wl2_ref,
                     g_ref, act_ref, *, kc):
    inv = 1.0 / jnp.sqrt(1.0 + BN_EPS)

    # ---- global branch G: Linear -> BN -> ReLU -> Linear -> Softmax ----
    h = jnp.dot(theta_g_ref[...], wg1_ref[...], preferred_element_type=jnp.float32)
    h = jnp.maximum(h * inv, 0.0)
    logits = jnp.dot(h, wg2_ref[...], preferred_element_type=jnp.float32)
    m = jnp.max(logits, axis=-1, keepdims=True)
    e = jnp.exp(logits - m)
    g_ref[...] = e / jnp.sum(e, axis=-1, keepdims=True)

    # ---- local branch L: Conv1d -> BN -> ReLU -> Conv1d(1x1) -> Sigmoid ----
    # Conv1d expressed as one (nb*T, C) @ (C, C//beta) matmul per tap (batched over nb).
    hl = jnp.dot(taps_ref[0], wl1_ref[0], preferred_element_type=jnp.float32)
    for k in range(1, kc):
        hl = hl + jnp.dot(taps_ref[k], wl1_ref[k], preferred_element_type=jnp.float32)
    hl = jnp.maximum(hl * inv, 0.0)
    act_ref[...] = jax.nn.sigmoid(
        jnp.dot(hl, wl2_ref[...], preferred_element_type=jnp.float32))


def branches(theta_g, taps, w_g1, w_g2, w_l1t, w_l2t):
    nct, t = theta_g.shape
    kc, nbt, c = taps.shape
    hidden = w_g1.shape[1]
    k_adapt = w_g2.shape[1]
    c_mid = w_l1t.shape[2]
    body = functools.partial(_branches_kernel, kc=kc)
    return pl.pallas_call(
        body,
        out_shape=(jax.ShapeDtypeStruct((nct, k_adapt), jnp.float32),
                   jax.ShapeDtypeStruct((nbt, c), jnp.float32)),
        grid_spec=pltpu.PrefetchScalarGridSpec(
            num_scalar_prefetch=0,
            grid=(1,),
            in_specs=[
                pl.BlockSpec((nct, t), lambda i: (0, 0)),
                pl.BlockSpec((kc, nbt, c), lambda i: (0, 0, 0)),
                pl.BlockSpec((t, hidden), lambda i: (0, 0)),
                pl.BlockSpec((hidden, k_adapt), lambda i: (0, 0)),
                pl.BlockSpec((kc, c, c_mid), lambda i: (0, 0, 0)),
                pl.BlockSpec((c_mid, c), lambda i: (0, 0)),
            ],
            out_specs=(pl.BlockSpec((nct, k_adapt), lambda i: (0, 0)),
                       pl.BlockSpec((nbt, c), lambda i: (0, 0))),
        ),
    )(theta_g, taps, w_g1, w_g2, w_l1t, w_l2t)


# ------- kernel 3: gating + temporal adaptive aggregation (depthwise temporal conv) -------
def _agg_kernel(x_ref, act_ref, kern_ref, o_ref, *, t, k_adapt, pad):
    # Process the zero-offset tap first so it initializes the output block;
    # boundary taps accumulate into static partial ranges of the leading
    # (untiled) time axis -- no padded copy of the big tensor anywhere.
    taps = list(range(k_adapt))
    if 0 <= pad < k_adapt:
        taps = [pad] + [k for k in taps if k != pad]

    initialized = False
    for k in taps:
        ofs = k - pad                       # source time = output time + ofs
        lo_out, hi_out = max(0, -ofs), min(t, t - ofs)
        if hi_out <= lo_out:
            continue
        lo_in, hi_in = lo_out + ofs, hi_out + ofs
        coef = act_ref[lo_in:hi_in] * kern_ref[k:k + 1]     # (L, c_blk, 1)
        term = coef * x_ref[lo_in:hi_in]                    # (L, c_blk, hw_blk)
        if not initialized:
            if lo_out == 0 and hi_out == t:
                o_ref[...] = term
            else:
                o_ref[...] = jnp.zeros_like(o_ref)
                o_ref[lo_out:hi_out] = o_ref[lo_out:hi_out] + term
            initialized = True
        else:
            o_ref[lo_out:hi_out] = o_ref[lo_out:hi_out] + term

    if not initialized:                     # degenerate config: no valid tap
        o_ref[...] = jnp.zeros_like(o_ref)


def temporal_adaptive_aggregation(x4, act4, kern4, c_blk, hw_blk, pad, stride):
    nb, t, c, hw = x4.shape
    k_adapt = kern4.shape[1]
    # TODO(synk): only the default stride=1 configuration with output length ==
    # num_segments is implemented (as required by the module's reshape anyway).
    assert stride == 1 and (t + 2 * pad - k_adapt) // stride + 1 == t
    body = functools.partial(_agg_kernel, t=t, k_adapt=k_adapt, pad=pad)
    return pl.pallas_call(
        body,
        out_shape=jax.ShapeDtypeStruct((nb, t, c, hw), jnp.float32),
        grid_spec=pltpu.PrefetchScalarGridSpec(
            num_scalar_prefetch=0,
            grid=(nb, c // c_blk, hw // hw_blk),
            in_specs=[
                pl.BlockSpec((None, t, c_blk, hw_blk),
                             lambda b, ci, hi: (b, 0, ci, hi)),
                pl.BlockSpec((None, t, c_blk, 1), lambda b, ci, hi: (b, 0, ci, 0)),
                pl.BlockSpec((None, k_adapt, c_blk, 1),
                             lambda b, ci, hi: (b, 0, ci, 0)),
            ],
            out_specs=pl.BlockSpec((None, t, c_blk, hw_blk),
                                   lambda b, ci, hi: (b, 0, ci, hi)),
        ),
        compiler_params=pltpu.CompilerParams(
            dimension_semantics=("parallel", "parallel", "parallel"),
            vmem_limit_bytes=_VMEM_LIMIT),
    )(x4, act4, kern4)


# ---------------------------- parameter init (deterministic, synthetic) ----------------------------
def init_tam_params(key, in_channels, num_segments, alpha=2, adaptive_kernel_size=3,
                    beta=4, conv1d_kernel_size=3, init_std=0.001):
    c_mid = in_channels // beta
    k1, k2, k3, k4 = jax.random.split(key, 4)
    # nn.Linear weights (stored transposed: (in, out)), normal_init std=init_std, no bias.
    w_g1 = init_std * jax.random.normal(k1, (num_segments, num_segments * alpha), jnp.float32)
    w_g2 = init_std * jax.random.normal(k2, (num_segments * alpha, adaptive_kernel_size), jnp.float32)
    # nn.Conv1d weights, kaiming-style scale (stored as (K, out, in) and (out, in)), no bias.
    w_l1 = jax.random.normal(k3, (conv1d_kernel_size, c_mid, in_channels), jnp.float32) \
        * math.sqrt(2.0 / (in_channels * conv1d_kernel_size))
    w_l2 = jax.random.normal(k4, (in_channels, c_mid), jnp.float32) * math.sqrt(2.0 / c_mid)
    return dict(w_g1=w_g1, w_g2=w_g2, w_l1=w_l1, w_l2=w_l2)


# ------------------------------------- TAM forward (wrapper) -------------------------------------
def tam_forward(x, params, num_segments, conv1d_kernel_size=3,
                adaptive_convolution_stride=1, adaptive_convolution_padding=1):
    n, c, h, w = x.shape
    t = num_segments
    nb = n // t
    hw = h * w

    # Free reshape: (n, c, h, w) == (nb, t, c, h, w) -> (nb, t, c, hw); no transpose.
    x4 = x.reshape(nb, t, c, hw).astype(jnp.float32)

    c_blk, hw_blk = _choose_blocks(c, hw, t)

    theta = spatial_pool(x4, c_blk, hw_blk)                          # (nb, t, c)

    # Tiny-tensor prep for the fused branches kernel (negligible HBM traffic).
    theta_g = theta.transpose(0, 2, 1).reshape(nb * c, t)            # (nb*c, t)
    pc = conv1d_kernel_size // 2
    theta_pad = jnp.pad(theta, ((0, 0), (pc, pc), (0, 0)))           # (nb, t+2pc, c)
    taps = jnp.stack([theta_pad[:, k:k + t, :].reshape(nb * t, c)
                      for k in range(conv1d_kernel_size)], axis=0)   # (kc, nb*t, c)
    w_l1t = params["w_l1"].transpose(0, 2, 1)                        # (kc, c, c_mid)
    w_l2t = params["w_l2"].T                                         # (c_mid, c)

    g, act2 = branches(theta_g, taps, params["w_g1"], params["w_g2"], w_l1t, w_l2t)
    kern4 = g.reshape(nb, c, -1).transpose(0, 2, 1)[..., None]       # (nb, K, c, 1) tiny
    act4 = act2.reshape(nb, t, c)[..., None]                         # (nb, t, c, 1) free

    y = temporal_adaptive_aggregation(x4, act4, kern4, c_blk, hw_blk,
                                      adaptive_convolution_padding,
                                      adaptive_convolution_stride)   # (nb, t, c, hw)
    # Free reshape back to NCHW.
    return y.reshape(n, c, h, w).astype(x.dtype)


# ---------------------------------- pure-JAX reference for checking ----------------------------------
def tam_reference(x, params, num_segments, conv1d_kernel_size=3, adaptive_convolution_padding=1):
    n, c, h, w = x.shape
    t = num_segments
    nb = n // t
    inv = 1.0 / jnp.sqrt(1.0 + BN_EPS)
    x5 = x.reshape(nb, t, c, h, w).transpose(0, 2, 1, 3, 4)
    theta = x5.mean(axis=(3, 4))                                     # (nb, c, T)
    tht = theta.reshape(nb * c, t)
    g = jnp.maximum(tht @ params["w_g1"] * inv, 0.0) @ params["w_g2"]
    g = jax.nn.softmax(g, axis=-1).reshape(nb, c, -1)
    pc = conv1d_kernel_size // 2
    thp = jnp.pad(theta, ((0, 0), (0, 0), (pc, pc)))
    c_mid = params["w_l1"].shape[1]
    hloc = jnp.zeros((nb, c_mid, t), jnp.float32)
    for k in range(conv1d_kernel_size):
        hloc = hloc + jnp.einsum("oi,bit->bot", params["w_l1"][k], thp[:, :, k:k + t])
    hloc = jnp.maximum(hloc * inv, 0.0)
    act = jax.nn.sigmoid(jnp.einsum("oi,bit->bot", params["w_l2"], hloc))
    new_x = x5 * act[:, :, :, None, None]
    pad = adaptive_convolution_padding
    nxp = jnp.pad(new_x, ((0, 0), (0, 0), (pad, pad), (0, 0), (0, 0)))
    y = jnp.zeros_like(new_x)
    for k in range(g.shape[-1]):
        y = y + g[:, :, k][:, :, None, None, None] * nxp[:, :, k:k + t]
    return y.transpose(0, 2, 1, 3, 4).reshape(n, c, h, w)


if __name__ == "__main__":
    in_channels, num_segments, num_batches = 16, 8, 2
    h = w = 16
    n = num_batches * num_segments

    key = jax.random.PRNGKey(0)
    kx, kp = jax.random.split(key)
    x = jax.random.normal(kx, (n, in_channels, h, w), jnp.float32)
    params = init_tam_params(kp, in_channels, num_segments)

    y = tam_forward(x, params, num_segments)
    y = jax.block_until_ready(y)

    y_ref = tam_reference(x, params, num_segments)
    assert y.shape == x.shape
    err = float(jnp.max(jnp.abs(y - y_ref)))
    assert jnp.allclose(y, y_ref, rtol=1e-3, atol=1e-4), err
    print("KERNEL_OK")
</pallas_src>

<mosaic_0001>
module attributes {stable_mosaic.version = 11 : i64} {
  func.func @_pool_kernel(%arg0: i32, %arg1: i32, %arg2: i32, %arg3: memref<1x8x16x256xf32, #tpu.memory_space<vmem>>, %arg4: memref<1x8x16xf32, #tpu.memory_space<vmem>>) attributes {dimension_semantics = [#tpu.dimension_semantics<parallel>, #tpu.dimension_semantics<parallel>, #tpu.dimension_semantics<arbitrary>], iteration_bounds = array<i64: 2, 1, 1>, scalar_prefetch = 0 : i64, scratch_operands = 0 : i64, tpu.core_type = #tpu.core_type<tc>, window_params = [{transform_indices = @transform_0, window_bounds = array<i64: 1, 8, 16, 256>}, {transform_indices = @transform_1, window_bounds = array<i64: 1, 8, 16>}]} {
    %c0_i32 = arith.constant 0 : i32
    %0 = arith.cmpi eq, %arg2, %c0_i32 : i32
    %1 = arith.extui %0 : i1 to i32
    %c0_i32_0 = arith.constant 0 : i32
    %2 = arith.cmpi ne, %1, %c0_i32_0 : i32
    scf.if %2 {
      %cst_12 = arith.constant 0.000000e+00 : f32
      %15 = vector.broadcast %cst_12 : f32 to vector<8x16xf32>
      %c0_13 = arith.constant 0 : index
      %c0_14 = arith.constant 0 : index
      %c0_15 = arith.constant 0 : index
      %16 = vector.load %arg4[%c0_13, %c0_14, %c0_15] : memref<1x8x16xf32, #tpu.memory_space<vmem>>, vector<1x8x16xf32>
      %17 = vector.shape_cast %16 : vector<1x8x16xf32> to vector<8x16xf32>
      %18 = vector.shape_cast %15 : vector<8x16xf32> to vector<1x8x16xf32>
      tpu.vector_store %arg4[%c0_13, %c0_14, %c0_15], %18 {strides = array<i32>} : memref<1x8x16xf32, #tpu.memory_space<vmem>>, vector<1x8x16xf32>,
    } else {
    }
    %c0 = arith.constant 0 : index
    %c0_1 = arith.constant 0 : index
    %c0_2 = arith.constant 0 : index
    %3 = vector.load %arg4[%c0, %c0_1, %c0_2] : memref<1x8x16xf32, #tpu.memory_space<vmem>>, vector<1x8x16xf32>
    %4 = vector.shape_cast %3 : vector<1x8x16xf32> to vector<8x16xf32>
    %c0_3 = arith.constant 0 : index
    %c0_4 = arith.constant 0 : index
    %c0_5 = arith.constant 0 : index
    %c0_6 = arith.constant 0 : index
    %5 = vector.load %arg3[%c0_3, %c0_4, %c0_5, %c0_6] : memref<1x8x16x256xf32, #tpu.memory_space<vmem>>, vector<1x8x16x256xf32>
    %6 = vector.shape_cast %5 : vector<1x8x16x256xf32> to vector<8x16x256xf32>
    %cst = arith.constant dense<0.000000e+00> : vector<8x16xf32>
    %7 = vector.multi_reduction <add>, %6, %cst [2] : vector<8x16x256xf32> to vector<8x16xf32>
    %8 = arith.addf %4, %7 : vector<8x16xf32>
    %c0_7 = arith.constant 0 : index
    %c0_8 = arith.constant 0 : index
    %c0_9 = arith.constant 0 : index
    %9 = vector.load %arg4[%c0_7, %c0_8, %c0_9] : memref<1x8x16xf32, #tpu.memory_space<vmem>>, vector<1x8x16xf32>
    %10 = vector.shape_cast %9 : vector<1x8x16xf32> to vector<8x16xf32>
    %11 = vector.shape_cast %8 : vector<8x16xf32> to vector<1x8x16xf32>
    tpu.vector_store %arg4[%c0_7, %c0_8, %c0_9], %11 {strides = array<i32>} : memref<1x8x16xf32, #tpu.memory_space<vmem>>, vector<1x8x16xf32>,
    %c0_i32_10 = arith.constant 0 : i32
    %12 = arith.cmpi eq, %arg2, %c0_i32_10 : i32
    %13 = arith.extui %12 : i1 to i32
    %c0_i32_11 = arith.constant 0 : i32
    %14 = arith.cmpi ne, %13, %c0_i32_11 : i32
    scf.if %14 {
      %c0_12 = arith.constant 0 : index
      %c0_13 = arith.constant 0 : index
      %c0_14 = arith.constant 0 : index
      %15 = vector.load %arg4[%c0_12, %c0_13, %c0_14] : memref<1x8x16xf32, #tpu.memory_space<vmem>>, vector<1x8x16xf32>
      %16 = vector.shape_cast %15 : vector<1x8x16xf32> to vector<8x16xf32>
      %cst_15 = arith.constant 3.906250e-03 : f32
      %17 = vector.broadcast %cst_15 : f32 to vector<8x16xf32>
      %18 = arith.mulf %16, %17 : vector<8x16xf32>
      %c0_16 = arith.constant 0 : index
      %c0_17 = arith.constant 0 : index
      %c0_18 = arith.constant 0 : index
      %19 = vector.load %arg4[%c0_16, %c0_17, %c0_18] : memref<1x8x16xf32, #tpu.memory_space<vmem>>, vector<1x8x16xf32>
      %20 = vector.shape_cast %19 : vector<1x8x16xf32> to vector<8x16xf32>
      %21 = vector.shape_cast %18 : vector<8x16xf32> to vector<1x8x16xf32>
      tpu.vector_store %arg4[%c0_16, %c0_17, %c0_18], %21 {strides = array<i32>} : memref<1x8x16xf32, #tpu.memory_space<vmem>>, vector<1x8x16xf32>,
    } else {
    }
    return
  }
  func.func @transform_0(%arg0: i32, %arg1: i32, %arg2: i32) -> (i32, i32, i32, i32) {
    %c0_i32 = arith.constant 0 : i32
    %c0_i32_0 = arith.constant 0 : i32
    return %arg0, %c0_i32, %arg1, %arg2 : i32, i32, i32, i32
  }
  func.func @transform_1(%arg0: i32, %arg1: i32, %arg2: i32) -> (i32, i32, i32) {
    %c0_i32 = arith.constant 0 : i32
    %c0_i32_0 = arith.constant 0 : i32
    return %arg0, %c0_i32, %arg1 : i32, i32, i32
  }
}

</mosaic_0001>

<llo_original>
// kernel: tpu_custom_call.1
$region0: #{tpu_custom_call.1}
  #allocation0 [shape = 'u32[]', space=smem, size = 0x4, offset = 0x4, fixed_abs, tag = 'smem constant byte address 0x4 - core index']
  #allocation1 [shape = 'u32[144,128]{1,0:T(1,128)}', space=vmem, size = 0x12000, scoped, tag = 'internal scratch']
  %s0 = inlined_call_operand.hbm [shape: f32[2,8,16,256], index: 0, kind: input, shape index: {}]
  %s1 = inlined_call_operand.hbm [shape: f32[2,8,16], index: 1, kind: output, shape index: {}]
  %s2 = sld [smem:[#allocation0]]
  $region49: #{tpu_custom_call.1} parent=0
    _
  %s4 = ssub.s32 1, %s2
  %s5 = scalar_select 0, %s4, %s2
  $region1: #{tpu_custom_call.1} parent=0
    #allocation2 [shape = 'u8[262144]{0}', space=vmem, size = 0x40000, scoped, tag = 'input window, operand 0']
    #allocation3 [shape = 's32[2]{0}', space=sflag, size = 0x8, scoped, tag = 'scoped memory for tpu_custom_call.1']
    #allocation4 [shape = 's32[2]{0}', space=sflag, size = 0x8, scoped, tag = 'scoped memory for tpu_custom_call.1']
    #allocation5 [shape = 'u8[8192]{0}', space=vmem, size = 0x2000, scoped, tag = 'output window, operand 0']
    %6 = vsyncpa [#allocation3], 0
    %s7 = scalar_lea.sflag [#allocation3], 1
    %8 = vsyncpa %s7, 0
    %9 = vsyncpa [#allocation4], 0
    %s10 = scalar_lea.sflag [#allocation4], 1
    %11 = vsyncpa %s10, 0
    loop: start=0, step=1, limit=4
    $region2: #{tpu_custom_call.1} parent=1 // loop_pre_header
      _
    $region3: #{tpu_custom_call.1} parent=1 // loop_header
      %s13 = sphi 0, %s17
      %p14 = scmp.ge.s32.totalorder %s13, 4
      %s20 = sphi 0, %s39
      %s21 = sphi 0, %s35
      %s22 = sphi 0, %s31
      %s23 = sphi 0, %s20
      %s24 = sphi 0, %s21
      %s25 = sphi 0, %s22
      %s26 = sphi 0, %s23
      %s27 = sphi 0, %s24
      %s28 = sphi 0, %s25
      %s46 = sphi 0, %s48
      %s49 = sphi 0, %s46
      %s50 = sphi 0, %s49
      %s66 = sphi 0, %s50
      %s74 = sphi 0, %s76
      %s77 = sphi 0, %s74
      %s78 = sphi 0, %s77
      %s94 = sphi 0, %s78
    $region4: #{tpu_custom_call.1} parent=1 // loop_header_branch
      %16 = sbr.rel (%p14) target = $region8
    $region5: #{tpu_custom_call.1} parent=1 // loop_body
      %s18 = ssub.s32 %s13, 1
      %s19 = ssub.s32 %s13, 2
      %s29 = sadd.s32 1, %s22
      %p30 = scmp.ge.s32.totalorder %s29, 1
      %s31 = scalar_select %p30, 0, %s29
      %s32 = sadd.s32 1, %s21
      %s33 = scalar_select %p30, %s32, %s21
      %p34 = scmp.ge.s32.totalorder %s33, 1
      %s35 = scalar_select %p34, 0, %s33
      %s36 = sadd.s32 1, %s20
      %s37 = scalar_select %p34, %s36, %s20
      %p38 = scmp.ge.s32.totalorder %s37, 2
      %s39 = scalar_select %p38, 0, %s37
      %s40 = ssub.s32 %s20, %s39
      %s41 = ssub.s32 %s21, %s35
      %s42 = sor.u32 %s40, %s41
      %s43 = ssub.s32 %s22, %s31
      %s44 = sor.u32 %s42, %s43
      %p45 = scmp.eq.s32.totalorder %s44, 0
      %s47 = sadd.s32 %s46, 1
      %s48 = scalar_select %p45, %s46, %s47
      %p51 = pneg %p45
      %p52 = scmp.eq.s32.totalorder %s13, 1
      %p53 = por %p51, %p52
      %p54 = scmp.ne.s32.totalorder %s46, %s49
      %p55 = scmp.eq.s32.totalorder %s13, 0
      %p56 = por %p54, %p55
      %p57 = scmp.ne.s32.totalorder %s46, %s49
      %p58 = scmp.eq.s32.totalorder %s18, 1
      %p59 = por %p57, %p58
      %p60 = scmp.ne.s32.totalorder %s49, %s50
      %p61 = scmp.eq.s32.totalorder %s18, 0
      %p62 = por %p60, %p61
      %p63 = scmp.ne.s32.totalorder %s49, %s50
      %p64 = scmp.eq.s32.totalorder %s19, 1
      %p65 = por %p63, %p64
      %p67 = scmp.ne.s32.totalorder %s50, %s66
      %p68 = scmp.eq.s32.totalorder %s19, 0
      %p69 = por %p67, %p68
      %s70 = ssub.s32 %s20, %s39
      %s71 = ssub.s32 %s21, %s35
      %s72 = sor.u32 %s70, %s71
      %p73 = scmp.eq.s32.totalorder %s72, 0
      %s75 = sadd.s32 %s74, 1
      %s76 = scalar_select %p73, %s74, %s75
      %p79 = pneg %p73
      %p80 = scmp.eq.s32.totalorder %s13, 1
      %p81 = por %p79, %p80
      %p82 = scmp.ne.s32.totalorder %s74, %s77
      %p83 = scmp.eq.s32.totalorder %s13, 0
      %p84 = por %p82, %p83
      %p85 = scmp.ne.s32.totalorder %s74, %s77
      %p86 = scmp.eq.s32.totalorder %s18, 1
      %p87 = por %p85, %p86
      %p88 = scmp.ne.s32.totalorder %s77, %s78
      %p89 = scmp.eq.s32.totalorder %s18, 0
      %p90 = por %p88, %p89
      %p91 = scmp.ne.s32.totalorder %s77, %s78
      %p92 = scmp.eq.s32.totalorder %s19, 1
      %p93 = por %p91, %p92
      %p95 = scmp.ne.s32.totalorder %s78, %s94
      %p96 = scmp.eq.s32.totalorder %s19, 0
      %p97 = por %p95, %p96
      %p98 = scmp.le.s32.totalorder 1, %s13
      %p99 = scmp.lt.s32.totalorder %s13, 3
      %p100 = pnand %p98, %p99
      %p101 = pneg %p100
      // Predicated region
      $region9: #{tpu_custom_call.1} parent=5 // pred_check
        _
      $region10: #{tpu_custom_call.1} parent=5 // pred_check_branch
        %103 = sbr.rel (%p100) target = $region12
      $region11: #{tpu_custom_call.1} parent=5 // pred_region
        %s104 = ssub.s32 %s13, 1
      $region12: #{tpu_custom_call.1} parent=5 // pred_fallthru
        _
      %p105 = scmp.lt.s32.totalorder %s13, 2
      // Predicated region
      $region13: #{tpu_custom_call.1} parent=5 // pred_check
        %p106 = pneg %p105
      $region14: #{tpu_custom_call.1} parent=5 // pred_check_branch
        %108 = sbr.rel (%p106) target = $region16
      $region15: #{tpu_custom_call.1} parent=5 // pred_region
        // Predicated region
        $region17: #{tpu_custom_call.1} parent=15 // pred_check
          %p109 = pneg %p56
        $region18: #{tpu_custom_call.1} parent=15 // pred_check_branch
          %111 = sbr.rel (%p109) target = $region20
        $region19: #{tpu_custom_call.1} parent=15 // pred_region
          %s112 = sand.u32 %s46, 1
          %s113 = scalar_lea.sflag [#allocation3], %s112
          %s114 = sand.u32 %s46, 1
          %s115 = smul.addr %s114, 256
          %s116 = scalar_lea.vmem [#allocation2], %s115
          %s117 = smul.u32 2, %s21
          %s118 = smul.u32 2, %s22
          %s120 = ssub.s32 4096, 4096
          %121 = vsyncadd %s113, %s120
          %s122 = smul.addr %s117, 2
          %s123 = sadd.s32 %s118, %s122
          %s124 = smul.addr %s20, 32
          %s125 = sadd.s32 %s123, %s124
          %s126 = smul.addr %s125, 128
          %s127 = scalar_lea.hbm %s0, %s126
          %s128 = sshll.u32 %s116, 4
          %s129 = int_to_ptr.vmem [resolvable:$true] %s128
          %134 = dma.hbm_to_vmem [thread:$0]  %s127, 4096, %s129, %s113, 256, 256, 16
        $region20: #{tpu_custom_call.1} parent=15 // pred_fallthru
          _
      $region16: #{tpu_custom_call.1} parent=5 // pred_fallthru
        _
      %p135 = scmp.le.s32.totalorder 1, %s13
      %p136 = scmp.lt.s32.totalorder %s13, 3
      %p137 = pnand %p135, %p136
      %p138 = pneg %p137
      // Predicated region
      $region21: #{tpu_custom_call.1} parent=5 // pred_check
        _
      $region22: #{tpu_custom_call.1} parent=5 // pred_check_branch
        %140 = sbr.rel (%p137) target = $region24
      $region23: #{tpu_custom_call.1} parent=5 // pred_region
        %s141 = ssub.s32 %s13, 1
        %s142 = sand.u32 %s49, 1
        %s143 = scalar_lea.sflag [#allocation3], %s142
        %s144 = sand.u32 %s49, 1
        %s145 = smul.addr %s144, 256
        %s146 = scalar_lea.vmem [#allocation2], %s145
        // Predicated region
        $region25: #{tpu_custom_call.1} parent=23 // pred_check
          %p147 = pneg %p62
        $region26: #{tpu_custom_call.1} parent=23 // pred_check_branch
          %149 = sbr.rel (%p147) target = $region28
        $region27: #{tpu_custom_call.1} parent=23 // pred_region
          %150 = dma.done %s143, 4096
        $region28: #{tpu_custom_call.1} parent=23 // pred_fallthru
          _
        %s151 = sand.u32 %s49, 1
        %s152 = scalar_lea.sflag [#allocation3], %s151
        %s153 = sand.u32 %s49, 1
        %s154 = smul.addr %s153, 256
        %s155 = scalar_lea.vmem [#allocation2], %s154
        %p156 = pneg %p62
        %p157 = pneg %p59
        %p158 = pneg %p90
        %p159 = pneg %p87
        %s160 = sand.u32 %s77, 1
        %s161 = scalar_lea.sflag [#allocation4], %s160
        %s162 = sand.u32 %s77, 1
        %s163 = smul.addr %s162, 8
        %s164 = scalar_lea.vmem [#allocation5], %s163
        %s165 = smul.u32 2, %s24
        %s166 = smul.u32 2, %s25
        %p167 = scmp.eq.s32.totalorder %s25, 0
        // Predicated region
        $region29: #{tpu_custom_call.1} parent=23 // pred_check
          %p168 = pneg %p167
        $region30: #{tpu_custom_call.1} parent=23 // pred_check_branch
          %170 = sbr.rel (%p168) target = $region32
        $region31: #{tpu_custom_call.1} parent=23 // pred_region
          %vm171 = vcmask 130048
          %172 = vst.msk [vmem:[%s164] sm:$0xff] %vm171, 0.0
        $region32: #{tpu_custom_call.1} parent=23 // pred_fallthru
          _
        %v173 = vld [vmem:[%s164] sm:$0xff]
        %v174 = vld [vmem:[%s146] sm:$0xff]
        %v175 = vld [vmem:[%s146 + $0x8] sm:$0xff]
        %v176 = vld [vmem:[%s146 + $0x10] sm:$0xff]
        %v177 = vld [vmem:[%s146 + $0x18] sm:$0xff]
        %v178 = vld [vmem:[%s146 + $0x20] sm:$0xff]
        %v179 = vld [vmem:[%s146 + $0x28] sm:$0xff]
        %v180 = vld [vmem:[%s146 + $0x30] sm:$0xff]
        %v181 = vld [vmem:[%s146 + $0x38] sm:$0xff]
        %v182 = vld [vmem:[%s146 + $0x40] sm:$0xff]
        %v183 = vld [vmem:[%s146 + $0x48] sm:$0xff]
        %v184 = vld [vmem:[%s146 + $0x50] sm:$0xff]
        %v185 = vld [vmem:[%s146 + $0x58] sm:$0xff]
        %v186 = vld [vmem:[%s146 + $0x60] sm:$0xff]
        %v187 = vld [vmem:[%s146 + $0x68] sm:$0xff]
        %v188 = vld [vmem:[%s146 + $0x70] sm:$0xff]
        %v189 = vld [vmem:[%s146 + $0x78] sm:$0xff]
        %v190 = vld [vmem:[%s146 + $0x80] sm:$0xff]
        %v191 = vld [vmem:[%s146 + $0x88] sm:$0xff]
        %v192 = vld [vmem:[%s146 + $0x90] sm:$0xff]
        %v193 = vld [vmem:[%s146 + $0x98] sm:$0xff]
        %v194 = vld [vmem:[%s146 + $0xa0] sm:$0xff]
        %v195 = vld [vmem:[%s146 + $0xa8] sm:$0xff]
        %v196 = vld [vmem:[%s146 + $0xb0] sm:$0xff]
        %v197 = vld [vmem:[%s146 + $0xb8] sm:$0xff]
        %v198 = vld [vmem:[%s146 + $0xc0] sm:$0xff]
        %v199 = vld [vmem:[%s146 + $0xc8] sm:$0xff]
        %v200 = vld [vmem:[%s146 + $0xd0] sm:$0xff]
        %v201 = vld [vmem:[%s146 + $0xd8] sm:$0xff]
        %v202 = vld [vmem:[%s146 + $0xe0] sm:$0xff]
        %v203 = vld [vmem:[%s146 + $0xe8] sm:$0xff]
        %v204 = vld [vmem:[%s146 + $0xf0] sm:$0xff]
        %v205 = vld [vmem:[%s146 + $0xf8] sm:$0xff]
        %v206 = vadd.f32 %v174, %v175
        %207 = vadd.xlane.f32.xlu0 %v206
        %v208 = vpop.xlane.xlu0 %207
        %v209 = vadd.f32 %v176, %v177
        %210 = vadd.xlane.f32.xlu0 %v209
        %v211 = vpop.xlane.xlu0 %210
        %v212 = vadd.f32 %v178, %v179
        %213 = vadd.xlane.f32.xlu0 %v212
        %v214 = vpop.xlane.xlu0 %213
        %v215 = vadd.f32 %v180, %v181
        %216 = vadd.xlane.f32.xlu0 %v215
        %v217 = vpop.xlane.xlu0 %216
        %v218 = vadd.f32 %v182, %v183
        %219 = vadd.xlane.f32.xlu0 %v218
        %v220 = vpop.xlane.xlu0 %219
        %v221 = vadd.f32 %v184, %v185
        %222 = vadd.xlane.f32.xlu0 %v221
        %v223 = vpop.xlane.xlu0 %222
        %v224 = vadd.f32 %v186, %v187
        %225 = vadd.xlane.f32.xlu0 %v224
        %v226 = vpop.xlane.xlu0 %225
        %v227 = vadd.f32 %v188, %v189
        %228 = vadd.xlane.f32.xlu0 %v227
        %v229 = vpop.xlane.xlu0 %228
        %v230 = vadd.f32 %v190, %v191
        %231 = vadd.xlane.f32.xlu0 %v230
        %v232 = vpop.xlane.xlu0 %231
        %v233 = vadd.f32 %v192, %v193
        %234 = vadd.xlane.f32.xlu0 %v233
        %v235 = vpop.xlane.xlu0 %234
        %v236 = vadd.f32 %v194, %v195
        %237 = vadd.xlane.f32.xlu0 %v236
        %v238 = vpop.xlane.xlu0 %237
        %v239 = vadd.f32 %v196, %v197
        %240 = vadd.xlane.f32.xlu0 %v239
        %v241 = vpop.xlane.xlu0 %240
        %v242 = vadd.f32 %v198, %v199
        %243 = vadd.xlane.f32.xlu0 %v242
        %v244 = vpop.xlane.xlu0 %243
        %v245 = vadd.f32 %v200, %v201
        %246 = vadd.xlane.f32.xlu0 %v245
        %v247 = vpop.xlane.xlu0 %246
        %v248 = vadd.f32 %v202, %v203
        %249 = vadd.xlane.f32.xlu0 %v248
        %v250 = vpop.xlane.xlu0 %249
        %v251 = vadd.f32 %v204, %v205
        %252 = vadd.xlane.f32.xlu0 %v251
        %v253 = vpop.xlane.xlu0 %252
        %v270 = vlaneseq
        %v271 = vand.u32 %v270, 127
        %v272 = vlaneseq
        %v273 = vshrl.u32 %v272, 7
        %v274 = vsub.s32 %v271, %v273
        %v275 = vrot.slane %v208, %v274
        %v276 = vadd.s32 %v271, 4294967288
        %v277 = vlaneseq
        %v278 = vshrl.u32 %v277, 7
        %v279 = vsub.s32 %v276, %v278
        %v280 = vrot.slane %v211, %v279
        %vm281 = vcmask 130112
        %v282 = vsel %vm281, %v280, %v275
        %v283 = vlaneseq
        %v284 = vshrl.u32 %v283, 7
        %v285 = vsub.s32 %v271, %v284
        %v286 = vrot.slane %v214, %v285
        %v287 = vlaneseq
        %v288 = vshrl.u32 %v287, 7
        %v289 = vsub.s32 %v276, %v288
        %v290 = vrot.slane %v217, %v289
        %v291 = vsel %vm281, %v290, %v286
        %v292 = vlaneseq
        %v293 = vshrl.u32 %v292, 7
        %v294 = vsub.s32 %v271, %v293
        %v295 = vrot.slane %v220, %v294
        %v296 = vlaneseq
        %v297 = vshrl.u32 %v296, 7
        %v298 = vsub.s32 %v276, %v297
        %v299 = vrot.slane %v223, %v298
        %v300 = vsel %vm281, %v299, %v295
        %v301 = vlaneseq
        %v302 = vshrl.u32 %v301, 7
        %v303 = vsub.s32 %v271, %v302
        %v304 = vrot.slane %v226, %v303
        %v305 = vlaneseq
        %v306 = vshrl.u32 %v305, 7
        %v307 = vsub.s32 %v276, %v306
        %v308 = vrot.slane %v229, %v307
        %v309 = vsel %vm281, %v308, %v304
        %v310 = vlaneseq
        %v311 = vshrl.u32 %v310, 7
        %v312 = vsub.s32 %v271, %v311
        %v313 = vrot.slane %v232, %v312
        %v314 = vlaneseq
        %v315 = vshrl.u32 %v314, 7
        %v316 = vsub.s32 %v276, %v315
        %v317 = vrot.slane %v235, %v316
        %v318 = vsel %vm281, %v317, %v313
        %v319 = vlaneseq
        %v320 = vshrl.u32 %v319, 7
        %v321 = vsub.s32 %v271, %v320
        %v322 = vrot.slane %v238, %v321
        %v323 = vlaneseq
        %v324 = vshrl.u32 %v323, 7
        %v325 = vsub.s32 %v276, %v324
        %v326 = vrot.slane %v241, %v325
        %v327 = vsel %vm281, %v326, %v322
        %v328 = vlaneseq
        %v329 = vshrl.u32 %v328, 7
        %v330 = vsub.s32 %v271, %v329
        %v331 = vrot.slane %v244, %v330
        %v332 = vlaneseq
        %v333 = vshrl.u32 %v332, 7
        %v334 = vsub.s32 %v276, %v333
        %v335 = vrot.slane %v247, %v334
        %v336 = vsel %vm281, %v335, %v331
        %v337 = vlaneseq
        %v338 = vshrl.u32 %v337, 7
        %v339 = vsub.s32 %v271, %v338
        %v340 = vrot.slane %v250, %v339
        %v341 = vlaneseq
        %v342 = vshrl.u32 %v341, 7
        %v343 = vsub.s32 %v276, %v342
        %v344 = vrot.slane %v253, %v343
        %v345 = vsel %vm281, %v344, %v340
        %vm346 = vcmask 1041409
        %v347 = vsel %vm346, %v291, %v282
        %vm348 = vcmask 1042434
        %v349 = vsel %vm348, %v300, %v347
        %vm350 = vcmask 1043459
        %v351 = vsel %vm350, %v309, %v349
        %vm352 = vcmask 1044484
        %v353 = vsel %vm352, %v318, %v351
        %vm354 = vcmask 1045509
        %v355 = vsel %vm354, %v327, %v353
        %vm356 = vcmask 1046534
        %v357 = vsel %vm356, %v336, %v355
        %vm358 = vcmask 1047559
        %v359 = vsel %vm358, %v345, %v357
        %v361 = vadd.f32 %v173, %v359
        %vm362 = vcmask 130048
        %363 = vst.msk [vmem:[%s164] sm:$0xff] %vm362, %v361
        // Predicated region
        $region33: #{tpu_custom_call.1} parent=23 // pred_check
          %p364 = pneg %p167
        $region34: #{tpu_custom_call.1} parent=23 // pred_check_branch
          %366 = sbr.rel (%p364) target = $region36
        $region35: #{tpu_custom_call.1} parent=23 // pred_region
          %v367 = vld [vmem:[%s164] sm:$0xff]
          %v368 = vmul.f32 %v367, 0.00390625
          %369 = vst.msk [vmem:[%s164] sm:$0xff] %vm362, %v368
        $region36: #{tpu_custom_call.1} parent=23 // pred_fallthru
          _
        %s370 = sand.u32 %s77, 1
        %s371 = scalar_lea.sflag [#allocation4], %s370
        %s372 = sand.u32 %s77, 1
        %s373 = smul.addr %s372, 8
        %s374 = scalar_lea.vmem [#allocation5], %s373
        // Predicated region
        $region37: #{tpu_custom_call.1} parent=23 // pred_check
          %p375 = pneg %p87
        $region38: #{tpu_custom_call.1} parent=23 // pred_check_branch
          %377 = sbr.rel (%p375) target = $region40
        $region39: #{tpu_custom_call.1} parent=23 // pred_region
          %s379 = ssub.s32 128, 128
          %380 = vsyncadd %s371, %s379
          %s381 = sadd.s32 %s24, %s23
          %s382 = smul.addr %s381, 128
          %s383 = scalar_lea.hbm %s1, %s382
          %s385 = sshll.u32 %s374, 4
          %s386 = int_to_ptr.vmem [resolvable:$true] %s385
          %388 = dma.vmem_to_hbm [thread:$0]  %s386, 128, %s383, %s371
        $region40: #{tpu_custom_call.1} parent=23 // pred_fallthru
          _
      $region24: #{tpu_custom_call.1} parent=5 // pred_fallthru
        _
      %p389 = scmp.le.s32.totalorder 2, %s13
      // Predicated region
      $region41: #{tpu_custom_call.1} parent=5 // pred_check
        %p390 = pneg %p389
      $region42: #{tpu_custom_call.1} parent=5 // pred_check_branch
        %392 = sbr.rel (%p390) target = $region44
      $region43: #{tpu_custom_call.1} parent=5 // pred_region
        %s393 = ssub.s32 %s13, 2
        // Predicated region
        $region45: #{tpu_custom_call.1} parent=43 // pred_check
          %p394 = pneg %p93
        $region46: #{tpu_custom_call.1} parent=43 // pred_check_branch
          %396 = sbr.rel (%p394) target = $region48
        $region47: #{tpu_custom_call.1} parent=43 // pred_region
          %s397 = sand.u32 %s78, 1
          %s398 = scalar_lea.sflag [#allocation4], %s397
          %s399 = sand.u32 %s78, 1
          %s400 = smul.addr %s399, 8
          %s401 = scalar_lea.vmem [#allocation5], %s400
          %402 = dma.done %s398, 128
        $region48: #{tpu_custom_call.1} parent=43 // pred_fallthru
          _
      $region44: #{tpu_custom_call.1} parent=5 // pred_fallthru
        _
    $region6: #{tpu_custom_call.1} parent=1 // loop_footer
      %s17 = sadd.s32 1, %s13
    $region7: #{tpu_custom_call.1} parent=1 // loop_footer_branch
      %12 = sbr.rel target = $region3
    $region8: #{tpu_custom_call.1} parent=1 // loop_exit
      _
    %403 = vsyncpa [#allocation3], 1
    %s404 = scalar_lea.sflag [#allocation3], 1
    %405 = vsyncpa %s404, 1
    %406 = vsyncpa [#allocation4], 1
    %s407 = scalar_lea.sflag [#allocation4], 1
    %408 = vsyncpa %s407, 1

</llo_original>
